<compile_context>
chip_gen: v5e
topology: v5e:2x2
jax: 0.10.0
libtpu: 0.0.40
codegen_flags: <defaults>
</compile_context>

<pallas_src>
import functools

import jax
import jax.numpy as jnp
from jax import lax
from jax.experimental import pallas as pl
from jax.experimental.pallas import tpu as pltpu

_LANES = 128
_SUBLANES = 8


def _cdiv(a, b):
    return -(-a // b)


def _round_up(a, b):
    return _cdiv(a, b) * b


def _num_tensorcores():
    """TensorCores addressable via a 'parallel' grid axis on this chip."""
    try:
        kind = jax.devices()[0].device_kind.lower()
    except Exception:
        return 1
    if any(tag in kind for tag in ("v2", "v3", "v4", "v5p", "v7", "tpu7")):
        return 2
    return 1


def _int_pow(v, n):
    """v**n for small positive int n via VPU multiplies (exp-by-squaring)."""
    result = None
    base = v
    while n:
        if n & 1:
            result = base if result is None else result * base
        n >>= 1
        if n:
            base = base * base
    return result


def _focal_loss_kernel(x_ref, t_ref, out_ref, *, gamma, binary_target,
                       tile_rows, inner_n, needs_mask, first_masked_blk,
                       rem_in_boundary):
    p = pl.program_id(0)
    i = pl.program_id(1)
    block_idx = p * inner_n + i

    @pl.when(i == 0)
    def _():
        out_ref[...] = jnp.zeros_like(out_ref)

    x = x_ref[...].astype(jnp.float32)
    t = t_ref[...].astype(jnp.float32)

    # Stable BCE-with-logits (identical to the PyTorch expression):
    #   x - x*t + max(-x,0) + log(exp(-max_val) + exp(-x - max_val))
    #   == max(x,0) - x*t + log1p(exp(-|x|))
    ez_x = jnp.exp(-jnp.abs(x))
    loss = jnp.maximum(x, 0.0) - x * t + jnp.log1p(ez_x)

    # z = -x*(2t-1); focal modulation = exp(gamma*logsigmoid(z)) = sigmoid(z)**gamma
    z = x * (1.0 - 2.0 * t)
    if binary_target:
        ez_z = ez_x                      # |z| == |x| when t in {0,1}
    else:
        ez_z = jnp.exp(-jnp.abs(z))

    g_is_int = (float(gamma) == int(gamma)) and (0 <= int(gamma) <= 32)
    if g_is_int:
        g = int(gamma)
        if g == 0:
            mod = jnp.ones_like(loss)
        else:
            # sigmoid(z), stably, without an extra exp: 1 EUP reciprocal.
            r = pl.reciprocal(1.0 + ez_z, approx=False)
            s = jnp.where(z >= 0.0, r, ez_z * r)
            mod = s * s if g == 2 else _int_pow(s, g)
    else:
        # General gamma: logsigmoid(z) = min(z,0) - log1p(exp(-|z|)).
        invprobs = jnp.minimum(z, 0.0) - jnp.log1p(ez_z)
        mod = jnp.exp(invprobs * float(gamma))

    fl = mod * loss                      # (tile_rows, 128)

    def _fold(v):
        # Fold the tile to one (8,128) vreg with pure VPU adds (no XLU).
        return jnp.sum(v.reshape(tile_rows // _SUBLANES, _SUBLANES, _LANES),
                       axis=0)

    if needs_mask:
        # Only the boundary block (and any grid steps past the real tiling)
        # pay the masking cost; full tiles accumulate unmasked.
        @pl.when(block_idx < first_masked_blk)
        def _():
            out_ref[0] += _fold(fl)

        @pl.when(block_idx >= first_masked_blk)
        def _():
            # Block-local indices: no int32 overflow regardless of total size.
            valid = jnp.where(block_idx == first_masked_blk,
                              jnp.int32(rem_in_boundary), jnp.int32(0))
            row = lax.broadcasted_iota(jnp.int32, fl.shape, 0)
            lane = lax.broadcasted_iota(jnp.int32, fl.shape, 1)
            masked = jnp.where(row * _LANES + lane < valid, fl, 0.0)
            out_ref[0] += _fold(masked)
    else:
        out_ref[0] += _fold(fl)


def focal_loss(x, target, gamma=2.0, *, tile_rows=2048, binary_target=False,
               num_parallel=None):
    """FocalLoss(gamma).forward(x, target) -> scalar float32 (mean reduction)."""
    if x.shape != target.shape:
        raise ValueError(
            "Target size ({}) must be the same as input size ({})".format(
                target.shape, x.shape))

    total = int(x.size)
    if total == 0:
        return jnp.float32(jnp.nan)      # mean over empty tensor

    # Minimal padding: only up to the next multiple of 8*128 elements (<=1023).
    rows = _cdiv(total, _LANES)
    rows_padded = _round_up(rows, _SUBLANES)
    pad = rows_padded * _LANES - total

    xf = x.reshape(-1)
    tf = target.reshape(-1)
    if pad:
        xf = jnp.pad(xf, (0, pad))
        tf = jnp.pad(tf, (0, pad))
    x2 = xf.reshape(rows_padded, _LANES)
    t2 = tf.reshape(rows_padded, _LANES)

    # Tile height: multiple of 8, no larger than the padded problem.
    tile_rows = max(_SUBLANES, (int(tile_rows) // _SUBLANES) * _SUBLANES)
    tile_rows = min(tile_rows, rows_padded)

    if num_parallel is None:
        num_parallel = _num_tensorcores()
    num_parallel = max(1, int(num_parallel))

    n_tiles = _cdiv(rows_padded, tile_rows)
    if num_parallel > 1 and n_tiles < num_parallel:
        if rows_padded >= num_parallel * _SUBLANES:
            # Shrink the tile instead of idling a TensorCore on medium inputs.
            tile_rows = _round_up(_cdiv(rows_padded, num_parallel), _SUBLANES)
            n_tiles = _cdiv(rows_padded, tile_rows)
        else:
            num_parallel = 1
    inner_n = _cdiv(n_tiles, num_parallel)

    per_block = tile_rows * _LANES
    num_blocks = num_parallel * inner_n
    needs_mask = (num_blocks * per_block != total)
    first_masked_blk = total // per_block
    rem_in_boundary = total - first_masked_blk * per_block
    last_tile = n_tiles - 1

    if num_blocks > n_tiles:
        # Grid steps past the real tiling re-read the last tile; their
        # contribution is zeroed in-kernel by the mask branch.
        def in_idx(p, i):
            return (jnp.minimum(p * inner_n + i, last_tile), 0)
    else:
        def in_idx(p, i):
            return (p * inner_n + i, 0)

    kernel = functools.partial(
        _focal_loss_kernel,
        gamma=float(gamma),
        binary_target=bool(binary_target),
        tile_rows=tile_rows,
        inner_n=inner_n,
        needs_mask=needs_mask,
        first_masked_blk=first_masked_blk,
        rem_in_boundary=rem_in_boundary,
    )

    g_is_int = (float(gamma) == int(gamma)) and (0 <= int(gamma) <= 32)
    transc_per = (3 if binary_target else 4) if g_is_int else (4 if binary_target else 5)
    bytes_in = x2.size * x2.dtype.itemsize + t2.size * t2.dtype.itemsize
    out_elems = num_parallel * _SUBLANES * _LANES
    cost = pl.CostEstimate(
        flops=14 * total,
        transcendentals=transc_per * total,
        bytes_accessed=bytes_in + out_elems * 4,
    )

    # Double-buffered footprint; raise the scoped-VMEM limit only if needed
    # (v5e default is 16 MiB; v6e/v7x default is 32 MiB).
    in_itemsz = x2.dtype.itemsize + t2.dtype.itemsize
    est_vmem = 2 * per_block * in_itemsz + 2 * out_elems * 4
    cp_kwargs = dict(dimension_semantics=("parallel", "arbitrary"))
    if est_vmem > 12 * 1024 * 1024:
        cp_kwargs["vmem_limit_bytes"] = min(est_vmem + (4 << 20), 60 * 1024 * 1024)

    partials = pl.pallas_call(
        kernel,
        out_shape=jax.ShapeDtypeStruct((num_parallel, _SUBLANES, _LANES),
                                       jnp.float32),
        grid_spec=pltpu.PrefetchScalarGridSpec(
            num_scalar_prefetch=0,
            grid=(num_parallel, inner_n),
            in_specs=[
                pl.BlockSpec((tile_rows, _LANES), in_idx),
                pl.BlockSpec((tile_rows, _LANES), in_idx),
            ],
            out_specs=pl.BlockSpec((1, _SUBLANES, _LANES),
                                   lambda p, i: (p, 0, 0)),
        ),
        compiler_params=pltpu.CompilerParams(**cp_kwargs),
        cost_estimate=cost,
    )(x2, t2)

    return jnp.sum(partials) / jnp.float32(total)


def focal_loss_ref(x, target, gamma=2.0):
    # Reference uses the original PyTorch formulation verbatim.
    x = x.astype(jnp.float32)
    t = target.astype(jnp.float32)
    max_val = jnp.maximum(-x, 0.0)
    loss = x - x * t + max_val + jnp.log(jnp.exp(-max_val) + jnp.exp(-x - max_val))
    z = -x * (t * 2.0 - 1.0)
    invprobs = jnp.minimum(z, 0.0) - jnp.log1p(jnp.exp(-jnp.abs(z)))
    return jnp.mean(jnp.exp(invprobs * gamma) * loss)


if __name__ == "__main__":
    key = jax.random.PRNGKey(0)
    k1, k2, k3, k4 = jax.random.split(key, 4)

    # NCHW logits and binary targets of the same shape (no padding needed).
    x = jax.random.normal(k1, (2, 4, 16, 16), dtype=jnp.float32)
    target = jax.random.bernoulli(k2, p=0.5, shape=(2, 4, 16, 16)).astype(
        jnp.float32)

    out = jax.block_until_ready(focal_loss(x, target, gamma=2.0))
    ref = focal_loss_ref(x, target, gamma=2.0)
    assert jnp.allclose(out, ref, rtol=1e-5, atol=1e-5), (out, ref)

    # Non-integer gamma exercises the exp(gamma * logsigmoid) fallback path.
    out15 = jax.block_until_ready(focal_loss(x, target, gamma=1.5))
    ref15 = focal_loss_ref(x, target, gamma=1.5)
    assert jnp.allclose(out15, ref15, rtol=1e-5, atol=1e-5), (out15, ref15)

    # Ragged shape: boundary-block mask, partial edge block, 2-way parallel
    # axis with an out-of-tiling grid step (clamped index_map).
    x_big = jax.random.normal(k3, (3, 5, 37, 29), dtype=jnp.float32)
    t_big = jax.random.bernoulli(k4, p=0.3, shape=(3, 5, 37, 29)).astype(
        jnp.float32)
    ref_big = focal_loss_ref(x_big, t_big, gamma=2.0)

    out_big = jax.block_until_ready(
        focal_loss(x_big, t_big, gamma=2.0, tile_rows=48, num_parallel=2))
    assert jnp.allclose(out_big, ref_big, rtol=1e-5, atol=1e-5), (out_big, ref_big)

    # Binary-target fast path with low-precision targets (fewer HBM bytes).
    out_bin = jax.block_until_ready(
        focal_loss(x_big, t_big.astype(jnp.bfloat16), gamma=2.0,
                   binary_target=True))
    assert jnp.allclose(out_bin, ref_big, rtol=1e-5, atol=1e-5), (out_bin, ref_big)

    print("KERNEL_OK")
</pallas_src>

<mosaic_0001>
module attributes {stable_mosaic.version = 11 : i64} {
  func.func @_focal_loss_kernel(%arg0: i32, %arg1: i32, %arg2: memref<16x128xf32, #tpu.memory_space<vmem>>, %arg3: memref<16x128xf32, #tpu.memory_space<vmem>>, %arg4: memref<1x8x128xf32, #tpu.memory_space<vmem>>) attributes {dimension_semantics = [#tpu.dimension_semantics<parallel>, #tpu.dimension_semantics<arbitrary>], iteration_bounds = array<i64: 1, 1>, scalar_prefetch = 0 : i64, scratch_operands = 0 : i64, tpu.core_type = #tpu.core_type<tc>, window_params = [{transform_indices = @transform_0, window_bounds = array<i64: 16, 128>}, {transform_indices = @transform_1, window_bounds = array<i64: 16, 128>}, {transform_indices = @transform_2, window_bounds = array<i64: 1, 8, 128>}]} {
    %c0_i32 = arith.constant 0 : i32
    %0 = arith.cmpi eq, %arg1, %c0_i32 : i32
    %1 = arith.extui %0 : i1 to i32
    %c0_i32_0 = arith.constant 0 : i32
    %2 = arith.cmpi ne, %1, %c0_i32_0 : i32
    scf.if %2 {
      %cst_17 = arith.constant 0.000000e+00 : f32
      %41 = vector.broadcast %cst_17 : f32 to vector<1x8x128xf32>
      %c0_18 = arith.constant 0 : index
      %c0_19 = arith.constant 0 : index
      %c0_20 = arith.constant 0 : index
      %42 = vector.load %arg4[%c0_18, %c0_19, %c0_20] : memref<1x8x128xf32, #tpu.memory_space<vmem>>, vector<1x8x128xf32>
      tpu.vector_store %arg4[%c0_18, %c0_19, %c0_20], %41 {strides = array<i32>} : memref<1x8x128xf32, #tpu.memory_space<vmem>>, vector<1x8x128xf32>,
    } else {
    }
    %c0 = arith.constant 0 : index
    %c0_1 = arith.constant 0 : index
    %3 = vector.load %arg2[%c0, %c0_1] : memref<16x128xf32, #tpu.memory_space<vmem>>, vector<16x128xf32>
    %c0_2 = arith.constant 0 : index
    %c0_3 = arith.constant 0 : index
    %4 = vector.load %arg3[%c0_2, %c0_3] : memref<16x128xf32, #tpu.memory_space<vmem>>, vector<16x128xf32>
    %5 = math.absf %3 : vector<16x128xf32>
    %cst = arith.constant 0.000000e+00 : f32
    %6 = vector.broadcast %cst : f32 to vector<16x128xf32>
    %7 = arith.subf %6, %5 : vector<16x128xf32>
    %8 = math.exp %7 : vector<16x128xf32>
    %cst_4 = arith.constant 0.000000e+00 : f32
    %9 = vector.broadcast %cst_4 : f32 to vector<16x128xf32>
    %10 = arith.maximumf %3, %9 : vector<16x128xf32>
    %11 = arith.mulf %3, %4 : vector<16x128xf32>
    %12 = arith.subf %10, %11 : vector<16x128xf32>
    %13 = math.log1p %8 : vector<16x128xf32>
    %14 = arith.addf %12, %13 : vector<16x128xf32>
    %cst_5 = arith.constant 2.000000e+00 : f32
    %15 = vector.broadcast %cst_5 : f32 to vector<16x128xf32>
    %16 = arith.mulf %15, %4 : vector<16x128xf32>
    %cst_6 = arith.constant 1.000000e+00 : f32
    %17 = vector.broadcast %cst_6 : f32 to vector<16x128xf32>
    %18 = arith.subf %17, %16 : vector<16x128xf32>
    %19 = arith.mulf %3, %18 : vector<16x128xf32>
    %20 = math.absf %19 : vector<16x128xf32>
    %cst_7 = arith.constant 0.000000e+00 : f32
    %21 = vector.broadcast %cst_7 : f32 to vector<16x128xf32>
    %22 = arith.subf %21, %20 : vector<16x128xf32>
    %23 = math.exp %22 : vector<16x128xf32>
    %cst_8 = arith.constant 1.000000e+00 : f32
    %24 = vector.broadcast %cst_8 : f32 to vector<16x128xf32>
    %25 = arith.addf %24, %23 : vector<16x128xf32>
    %26 = tpu.reciprocal %25 : vector<16x128xf32> -> vector<16x128xf32>
    %cst_9 = arith.constant 0.000000e+00 : f32
    %27 = vector.broadcast %cst_9 : f32 to vector<16x128xf32>
    %28 = arith.cmpf oge, %19, %27 : vector<16x128xf32>
    %29 = arith.mulf %23, %26 : vector<16x128xf32>
    %30 = arith.select %28, %26, %29 : vector<16x128xi1>, vector<16x128xf32>
    %31 = arith.mulf %30, %30 : vector<16x128xf32>
    %32 = arith.mulf %31, %14 : vector<16x128xf32>
    %c0_10 = arith.constant 0 : index
    %c0_11 = arith.constant 0 : index
    %c0_12 = arith.constant 0 : index
    %33 = vector.load %arg4[%c0_10, %c0_11, %c0_12] : memref<1x8x128xf32, #tpu.memory_space<vmem>>, vector<1x8x128xf32>
    %34 = vector.shape_cast %33 : vector<1x8x128xf32> to vector<8x128xf32>
    %35 = vector.shape_cast %32 : vector<16x128xf32> to vector<2x8x128xf32>
    %cst_13 = arith.constant dense<0.000000e+00> : vector<8x128xf32>
    %36 = vector.multi_reduction <add>, %35, %cst_13 [0] : vector<2x8x128xf32> to vector<8x128xf32>
    %37 = arith.addf %34, %36 : vector<8x128xf32>
    %c0_14 = arith.constant 0 : index
    %c0_15 = arith.constant 0 : index
    %c0_16 = arith.constant 0 : index
    %38 = vector.load %arg4[%c0_14, %c0_15, %c0_16] : memref<1x8x128xf32, #tpu.memory_space<vmem>>, vector<1x8x128xf32>
    %39 = vector.shape_cast %38 : vector<1x8x128xf32> to vector<8x128xf32>
    %40 = vector.shape_cast %37 : vector<8x128xf32> to vector<1x8x128xf32>
    tpu.vector_store %arg4[%c0_14, %c0_15, %c0_16], %40 {strides = array<i32>} : memref<1x8x128xf32, #tpu.memory_space<vmem>>, vector<1x8x128xf32>,
    return
  }
  func.func @transform_0(%arg0: i32, %arg1: i32) -> (i32, i32) {
    %c1_i32 = arith.constant 1 : i32
    %0 = arith.muli %arg0, %c1_i32 : i32
    %1 = arith.addi %0, %arg1 : i32
    %c0_i32 = arith.constant 0 : i32
    %c0_i32_0 = arith.constant 0 : i32
    return %1, %c0_i32 : i32, i32
  }
  func.func @transform_1(%arg0: i32, %arg1: i32) -> (i32, i32) {
    %c1_i32 = arith.constant 1 : i32
    %0 = arith.muli %arg0, %c1_i32 : i32
    %1 = arith.addi %0, %arg1 : i32
    %c0_i32 = arith.constant 0 : i32
    %c0_i32_0 = arith.constant 0 : i32
    return %1, %c0_i32 : i32, i32
  }
  func.func @transform_2(%arg0: i32, %arg1: i32) -> (i32, i32, i32) {
    %c0_i32 = arith.constant 0 : i32
    %c0_i32_0 = arith.constant 0 : i32
    %c0_i32_1 = arith.constant 0 : i32
    return %arg0, %c0_i32, %c0_i32_0 : i32, i32, i32
  }
}

</mosaic_0001>

<llo_original>
// kernel: tpu_custom_call.1
$region0: #{tpu_custom_call.1}
  #allocation0 [shape = 'u32[]', space=smem, size = 0x4, offset = 0x4, fixed_abs, tag = 'smem constant byte address 0x4 - core index']
  #allocation1 [shape = 'u32[72,128]{1,0:T(1,128)}', space=vmem, size = 0x9000, scoped, tag = 'internal scratch']
  %s0 = inlined_call_operand.hbm [shape: f32[16,128], index: 0, kind: input, shape index: {}]
  %s1 = inlined_call_operand.hbm [shape: f32[16,128], index: 1, kind: input, shape index: {}]
  %s2 = inlined_call_operand.hbm [shape: f32[1,8,128], index: 2, kind: output, shape index: {}]
  %s3 = sld [smem:[#allocation0]]
  $region30: #{tpu_custom_call.1} parent=0
    _
  %s5 = ssub.s32 1, %s3
  %s6 = scalar_select 0, %s5, %s3
  $region1: #{tpu_custom_call.1} parent=0
    #allocation2 [shape = 'u8[8192]{0}', space=vmem, size = 0x2000, scoped, tag = 'input window, operand 0, single buffered']
    #allocation3 [shape = 's32[1]{0}', space=sflag, size = 0x4, scoped, tag = 'scoped memory for tpu_custom_call.1']
    #allocation4 [shape = 's32[1]{0}', space=sflag, size = 0x4, scoped, tag = 'scoped memory for tpu_custom_call.1']
    #allocation5 [shape = 'u8[8192]{0}', space=vmem, size = 0x2000, scoped, tag = 'input window, operand 1, single buffered']
    #allocation6 [shape = 's32[1]{0}', space=sflag, size = 0x4, scoped, tag = 'scoped memory for tpu_custom_call.1']
    #allocation7 [shape = 'u8[4096]{0}', space=vmem, size = 0x1000, scoped, tag = 'output window, operand 0, single buffered']
    %7 = vsyncpa [#allocation3], 0
    %8 = vsyncpa [#allocation6], 0
    %9 = vsyncpa [#allocation4], 0
    // Predicated region
    $region2: #{tpu_custom_call.1} parent=1 // pred_check
      _
    $region3: #{tpu_custom_call.1} parent=1 // pred_check_branch
      %11 = sbr.rel (0) target = $region5
    $region4: #{tpu_custom_call.1} parent=1 // pred_region
      %s12 = sadd.s32 0, 0
      %s13 = smul.u32 2, %s12
      %15 = vsyncadd [#allocation3], 0
      %s16 = smul.addr %s13, 8
      %s17 = scalar_lea.hbm %s0, %s16
      %s18 = sshll.u32 %s17, 4
      %s19 = int_to_ptr.hbm [resolvable:$true] %s18
      %s20 = sshll.u32 [#allocation2], 4
      %s21 = int_to_ptr.vmem [resolvable:$true] %s20
      %26 = dma.hbm_to_vmem [thread:$0]  %s19, 256, %s21, [#allocation3], 128, 128, 8
    $region5: #{tpu_custom_call.1} parent=1 // pred_fallthru
      _
    // Predicated region
    $region6: #{tpu_custom_call.1} parent=1 // pred_check
      _
    $region7: #{tpu_custom_call.1} parent=1 // pred_check_branch
      %28 = sbr.rel (0) target = $region9
    $region8: #{tpu_custom_call.1} parent=1 // pred_region
      %s29 = sadd.s32 0, 0
      %s30 = smul.u32 2, %s29
      %32 = vsyncadd [#allocation6], 0
      %s33 = smul.addr %s30, 8
      %s34 = scalar_lea.hbm %s1, %s33
      %s35 = sshll.u32 %s34, 4
      %s36 = int_to_ptr.hbm [resolvable:$true] %s35
      %s37 = sshll.u32 [#allocation5], 4
      %s38 = int_to_ptr.vmem [resolvable:$true] %s37
      %43 = dma.hbm_to_vmem [thread:$0]  %s36, 256, %s38, [#allocation6], 128, 128, 8
    $region9: #{tpu_custom_call.1} parent=1 // pred_fallthru
      _
    // Predicated region
    $region10: #{tpu_custom_call.1} parent=1 // pred_check
      _
    $region11: #{tpu_custom_call.1} parent=1 // pred_check_branch
      %45 = sbr.rel (0) target = $region13
    $region12: #{tpu_custom_call.1} parent=1 // pred_region
      %47 = dma.done [#allocation3], 256
    $region13: #{tpu_custom_call.1} parent=1 // pred_fallthru
      _
    // Predicated region
    $region14: #{tpu_custom_call.1} parent=1 // pred_check
      _
    $region15: #{tpu_custom_call.1} parent=1 // pred_check_branch
      %49 = sbr.rel (0) target = $region17
    $region16: #{tpu_custom_call.1} parent=1 // pred_region
      %51 = dma.done [#allocation6], 256
    $region17: #{tpu_custom_call.1} parent=1 // pred_fallthru
      _
    %s52 = sadd.s32 0, 0
    %s53 = smul.u32 2, %s52
    %s54 = sadd.s32 0, 0
    %s55 = smul.u32 2, %s54
    %p56 = scmp.eq.s32.totalorder 0, 0
    // Predicated region
    $region18: #{tpu_custom_call.1} parent=1 // pred_check
      %p57 = pneg %p56
    $region19: #{tpu_custom_call.1} parent=1 // pred_check_branch
      %59 = sbr.rel (%p57) target = $region21
    $region20: #{tpu_custom_call.1} parent=1 // pred_region
      %60 = vst [vmem:[#allocation7] sm:$0xff] 0.0
    $region21: #{tpu_custom_call.1} parent=1 // pred_fallthru
      _
    %v61 = vld [vmem:[#allocation2] sm:$0xff]
    %v62 = vld [vmem:[#allocation2 + $0x8] sm:$0xff]
    %v63 = vld [vmem:[#allocation5] sm:$0xff]
    %v64 = vld [vmem:[#allocation5 + $0x8] sm:$0xff]
    %v65 = vand.u32 2147483647, %v61
    %v66 = vand.u32 2147483647, %v62
    %v67 = vsub.f32 0.0, %v65
    %v68 = vsub.f32 0.0, %v66
    %v69 = vmul.f32 %v67, 1.442695
    %v70 = vpow.pop %v69
    %v71 = vmul.f32 %v68, 1.442695
    %v72 = vpow.pop %v71
    %v73 = vmax.f32 %v61, 0.0
    %v74 = vmax.f32 %v62, 0.0
    %v75 = vmul.f32 %v61, %v63
    %v76 = vmul.f32 %v62, %v64
    %v77 = vsub.f32 %v73, %v75
    %v78 = vsub.f32 %v74, %v76
    %v79 = vadd.f32 %v70, 1.0
    %v80 = vlog2.pop %v79
    %v81 = vmul.f32 %v80, 0.6931472
    %v82 = vmul.f32 -0.5, %v70
    %v83 = vadd.f32 %v82, 1.0
    %v84 = vmul.f32 %v83, %v70
    %v85 = vand.u32 2147483647, %v70
    %vm86 = vcmp.lt.f32.partialorder %v85, 0.0004427343
    %v87 = vsel %vm86, %v84, %v81
    %v88 = vadd.f32 %v72, 1.0
    %v89 = vlog2.pop %v88
    %v90 = vmul.f32 %v89, 0.6931472
    %v91 = vmul.f32 -0.5, %v72
    %v92 = vadd.f32 %v91, 1.0
    %v93 = vmul.f32 %v92, %v72
    %v94 = vand.u32 2147483647, %v72
    %vm95 = vcmp.lt.f32.partialorder %v94, 0.0004427343
    %v96 = vsel %vm95, %v93, %v90
    %v97 = vadd.f32 %v77, %v87
    %v98 = vadd.f32 %v78, %v96
    %v99 = vmul.f32 %v63, 2.0
    %v100 = vmul.f32 %v64, 2.0
    %v101 = vsub.f32 1.0, %v99
    %v102 = vsub.f32 1.0, %v100
    %v103 = vmul.f32 %v61, %v101
    %v104 = vmul.f32 %v62, %v102
    %v105 = vand.u32 2147483647, %v103
    %v106 = vand.u32 2147483647, %v104
    %v107 = vsub.f32 0.0, %v105
    %v108 = vsub.f32 0.0, %v106
    %v109 = vmul.f32 %v107, 1.442695
    %v110 = vpow.pop %v109
    %v111 = vmul.f32 %v108, 1.442695
    %v112 = vpow.pop %v111
    %v113 = vadd.f32 %v110, 1.0
    %v114 = vadd.f32 %v112, 1.0
    %v115 = vrcp.pop %v113
    %v116 = vmul.f32 %v113, %v115
    %v117 = vsub.f32 1.0, %v116
    %v118 = vmul.f32 %v115, %v117
    %v119 = vadd.f32 %v115, %v118
    %vm120 = vweird.f32 %v113
    %vm121 = vweird.f32 %v115
    %vm122 = vmor %vm120, %vm121
    %v123 = vsel %vm122, %v115, %v119
    %v124 = vand.u32 2147483647, %v113
    %vm125 = vcmp.eq.f32.partialorder %v124, 8.507059e+37
    %v126 = vand.u32 %v113, 2147483648
    %v127 = vor.u32 1.1754944e-38, %v126
    %v128 = vsel %vm125, %v127, %v123
    %v129 = vrcp.pop %v114
    %v130 = vmul.f32 %v114, %v129
    %v131 = vsub.f32 1.0, %v130
    %v132 = vmul.f32 %v129, %v131
    %v133 = vadd.f32 %v129, %v132
    %vm134 = vweird.f32 %v114
    %vm135 = vweird.f32 %v129
    %vm136 = vmor %vm134, %vm135
    %v137 = vsel %vm136, %v129, %v133
    %v138 = vand.u32 2147483647, %v114
    %vm139 = vcmp.eq.f32.partialorder %v138, 8.507059e+37
    %v140 = vand.u32 %v114, 2147483648
    %v141 = vor.u32 1.1754944e-38, %v140
    %v142 = vsel %vm139, %v141, %v137
    %vm143 = vcmp.ge.f32.partialorder %v103, 0.0
    %vm144 = vcmp.ge.f32.partialorder %v104, 0.0
    %v145 = vmul.f32 %v110, %v128
    %v146 = vmul.f32 %v112, %v142
    %v147 = vsel %vm143, %v128, %v145
    %v148 = vsel %vm144, %v142, %v146
    %v149 = vmul.f32 %v147, %v147
    %v150 = vmul.f32 %v148, %v148
    %v151 = vmul.f32 %v149, %v97
    %v152 = vmul.f32 %v150, %v98
    %v153 = vld [vmem:[#allocation7] sm:$0xff]
    %v154 = vadd.f32 %v151, %v152
    %v155 = vadd.f32 %v153, %v154
    %156 = vst [vmem:[#allocation7] sm:$0xff] %v155
    // Predicated region
    $region22: #{tpu_custom_call.1} parent=1 // pred_check
      _
    $region23: #{tpu_custom_call.1} parent=1 // pred_check_branch
      %158 = sbr.rel (0) target = $region25
    $region24: #{tpu_custom_call.1} parent=1 // pred_region
      %160 = vsyncadd [#allocation4], 0
      %s162 = sshll.u32 [#allocation7], 4
      %s163 = int_to_ptr.vmem [resolvable:$true] %s162
      %s164 = sshll.u32 %s2, 4
      %s165 = int_to_ptr.hbm [resolvable:$true] %s164
      %167 = dma.vmem_to_hbm [thread:$0]  %s163, 128, %s165, [#allocation4]
    $region25: #{tpu_custom_call.1} parent=1 // pred_fallthru
      _
    // Predicated region
    $region26: #{tpu_custom_call.1} parent=1 // pred_check
      _
    $region27: #{tpu_custom_call.1} parent=1 // pred_check_branch
      %169 = sbr.rel (0) target = $region29
    $region28: #{tpu_custom_call.1} parent=1 // pred_region
      %171 = dma.done [#allocation4], 128
    $region29: #{tpu_custom_call.1} parent=1 // pred_fallthru
      _
    %172 = vsyncpa [#allocation3], 1
    %173 = vsyncpa [#allocation6], 1
    %174 = vsyncpa [#allocation4], 1

</llo_original>
